<compile_context>
chip_gen: v7x
topology: tpu7x:2x2x1
jax: 0.10.0
libtpu: 0.0.40
codegen_flags: <defaults>
</compile_context>

<pallas_src>
import functools
import math

import jax
import jax.numpy as jnp
from jax import lax
from jax.experimental import pallas as pl
from jax.experimental.pallas import tpu as pltpu

EPS = 1e-5          # torch.nn.LayerNorm default eps
_LANE = 128         # vreg lane width
_SUBLANE = 8        # f32 sublane count
_L_CAP = 512        # max packed lane width
_PACK_CAP = 8       # max rows packed side by side (bounds masked-reduction cost)
_F32_TEMPS = 6      # f32 intermediates materialised per live tile row (budgeting)


def _hw_info():
    """(vmem_capacity_bytes, tensorcores_per_chip), robust to missing APIs."""
    vmem = None
    cores = None
    try:
        info = pltpu.get_tpu_info()
        for name in ("vmem_capacity_bytes", "vmem_bytes", "vmem_size_bytes"):
            v = getattr(info, name, None)
            if v:
                vmem = int(v)
                break
        for name in ("num_cores", "core_count", "num_tensorcores", "tensorcore_count"):
            v = getattr(info, name, None)
            if v:
                cores = int(v)
                break
    except Exception:
        pass
    kind = ""
    try:
        kind = jax.devices()[0].device_kind.lower()
    except Exception:
        pass
    if vmem is None:
        vmem = (64 << 20) if "v7" in kind else (128 << 20)
    if cores is None:
        cores = 2 if ("v7" in kind or "v4" in kind or "v5p" in kind) else 1
    return vmem, max(1, cores)


def _choose_pack(N, D):
    """Smallest pack with (pack*D) % 128 == 0, used only when it costs no copy."""
    pack = _LANE // math.gcd(D, _LANE)
    if pack == 1:
        return 1
    if pack <= _PACK_CAP and pack * D <= _L_CAP and N % pack == 0:
        return pack
    return 1  # fallback: (tile, D) blocks with D == full last dim, zero copies


def _choose_tile_rows(rows, L, itemsize, vmem_bytes, num_cores):
    row_bytes = L * itemsize
    # ~2 MiB per pipeline buffer (measured mem-bound plateau); 4 MiB on parts
    # with 128 MiB VMEM so very wide D still gets >= 256-row tiles.
    target = (4 << 20) if vmem_bytes >= (96 << 20) else (2 << 20)
    tile = max(_SUBLANE, (target // row_bytes) // _SUBLANE * _SUBLANE)
    # VMEM budget: double-buffered in + out tiles at the input dtype plus the
    # f32 intermediates of the live tile; stay well inside physical VMEM.
    budget = min(vmem_bytes // 2, 48 << 20)
    live_row_bytes = L * (4 * itemsize + _F32_TEMPS * 4)
    tile = min(tile, max(_SUBLANE, (budget // live_row_bytes) // _SUBLANE * _SUBLANE))
    # Megacore (v7x): keep >= 2 grid steps per TensorCore when there is enough
    # work so each core can still double-buffer its DMAs; never force a split
    # on single-TensorCore chips (v5e/v6e).
    if num_cores > 1:
        min_steps = 2 * num_cores
        if rows >= min_steps * _SUBLANE and rows * row_bytes >= min_steps * (512 << 10):
            per_step = -(-rows // min_steps)
            tile = min(tile, max(_SUBLANE, per_step // _SUBLANE * _SUBLANE))
        elif rows >= 2 * _SUBLANE:
            per_step = -(-rows // num_cores)
            tile = min(tile, max(_SUBLANE, per_step // _SUBLANE * _SUBLANE))
    if tile >= rows:
        tile = rows  # one full block (allowed even when rows % 8 != 0)
    return tile


def _layernorm_kernel(x_ref, w_ref, b_ref, o_ref, *, dim, pack):
    """LayerNorm over width-`dim` lane segments of a (tile, pack*dim) block."""
    x = x_ref[...].astype(jnp.float32)
    inv_d = 1.0 / dim                      # constant reciprocal: no per-row divide

    if pack == 1:
        def seg_sum(v):                    # plain full-row lane reduction
            return jnp.sum(v, axis=-1, keepdims=True)
    else:
        # `pack` original rows live side by side on the lane axis; compute the
        # per-segment sums with masked lane reductions and broadcast them back.
        lane = lax.broadcasted_iota(jnp.int32, (1, x.shape[-1]), 1)
        masks = [(lane >= p * dim) & (lane < (p + 1) * dim) for p in range(pack)]

        def seg_sum(v):
            out = jnp.zeros_like(v)
            for m in masks:
                s = jnp.sum(jnp.where(m, v, 0.0), axis=-1, keepdims=True)
                out = jnp.where(m, s, out)
            return out

    mean = seg_sum(x) * inv_d
    centered = x - mean
    var = seg_sum(centered * centered) * inv_d
    inv = lax.rsqrt(var + EPS)             # EUP slot: free for a mem-bound kernel
    y = centered * inv * w_ref[...] + b_ref[...]
    o_ref[...] = y.astype(o_ref.dtype)


def identity_norm_layer(x, weight, bias):
    """LayerNorm over the last axis of x [N, D] with affine params (D,)."""
    N, D = x.shape
    itemsize = jnp.dtype(x.dtype).itemsize
    vmem_bytes, num_cores = _hw_info()

    pack = _choose_pack(N, D)
    L = pack * D
    rows = N // pack                                 # exact when pack > 1
    xp = x if pack == 1 else x.reshape(rows, L)      # bitcast reshape, no copy

    w32 = weight.astype(jnp.float32)
    b32 = bias.astype(jnp.float32)
    if pack > 1:
        w32 = jnp.tile(w32, pack)
        b32 = jnp.tile(b32, pack)
    w_in = w32.reshape(1, L)
    b_in = b32.reshape(1, L)

    tile = _choose_tile_rows(rows, L, itemsize, vmem_bytes, num_cores)
    grid = pl.cdiv(rows, tile)             # ragged last block: no pad, no slice

    live_bytes = tile * L * (4 * itemsize + _F32_TEMPS * 4) + 4 * L * 4
    vmem_limit = int(max(32 << 20, min((vmem_bytes * 3) // 4, live_bytes + (8 << 20))))

    kernel = functools.partial(_layernorm_kernel, dim=D, pack=pack)

    out = pl.pallas_call(
        kernel,
        out_shape=jax.ShapeDtypeStruct((rows, L), x.dtype),
        grid_spec=pltpu.PrefetchScalarGridSpec(
            num_scalar_prefetch=0,
            grid=(grid,),
            in_specs=[
                pl.BlockSpec((tile, L), lambda i: (i, 0)),
                # Constant index_map keeps gamma/beta resident (no per-step DMA).
                pl.BlockSpec((1, L), lambda i: (0, 0)),
                pl.BlockSpec((1, L), lambda i: (0, 0)),
            ],
            out_specs=pl.BlockSpec((tile, L), lambda i: (i, 0)),
        ),
        compiler_params=pltpu.CompilerParams(
            dimension_semantics=("parallel",),
            vmem_limit_bytes=vmem_limit,
        ),
    )(xp, w_in, b_in)

    return out if pack == 1 else out.reshape(N, D)


if __name__ == "__main__":
    def reference(x, w, b):
        m = jnp.mean(x, axis=-1, keepdims=True)
        v = jnp.mean((x - m) ** 2, axis=-1, keepdims=True)
        return (x - m) / jnp.sqrt(v + EPS) * w + b

    key = jax.random.PRNGKey(0)
    cases = [
        (16, 32),    # packed path (pack=4), single full block
        (300, 32),   # packed path, ragged grid (no pad / slice)
        (40, 128),   # lane-dense path, pack=1
        (24, 48),    # packed path (pack=8, L=384)
        (37, 100),   # pack=1 fallback (D not cheaply packable)
    ]
    for idx, (N, D) in enumerate(cases):
        k_x, k_w, k_b = jax.random.split(jax.random.fold_in(key, idx), 3)
        x = jax.random.normal(k_x, (N, D), dtype=jnp.float32)
        weight = 1.0 + 0.1 * jax.random.normal(k_w, (D,), dtype=jnp.float32)
        bias = 0.1 * jax.random.normal(k_b, (D,), dtype=jnp.float32)

        out = jax.block_until_ready(identity_norm_layer(x, weight, bias))
        ref = reference(x, weight, bias)
        assert out.shape == (N, D), f"shape mismatch for {(N, D)}"
        assert jnp.allclose(out, ref, atol=1e-5, rtol=1e-5), f"mismatch for {(N, D)}"

    print("KERNEL_OK")
</pallas_src>

<mosaic_0001>
module attributes {stable_mosaic.version = 11 : i64} {
  func.func @_layernorm_kernel(%arg0: i32, %arg1: memref<4x128xf32, #tpu.memory_space<vmem>>, %arg2: memref<1x128xf32, #tpu.memory_space<vmem>>, %arg3: memref<1x128xf32, #tpu.memory_space<vmem>>, %arg4: memref<4x128xf32, #tpu.memory_space<vmem>>) attributes {dimension_semantics = [#tpu.dimension_semantics<parallel>], iteration_bounds = array<i64: 1>, scalar_prefetch = 0 : i64, scratch_operands = 0 : i64, tpu.core_type = #tpu.core_type<tc>, window_params = [{transform_indices = @transform_0, window_bounds = array<i64: 4, 128>}, {pipeline_mode = #tpu.pipeline_mode<synchronous>, transform_indices = @transform_1, window_bounds = array<i64: 1, 128>}, {pipeline_mode = #tpu.pipeline_mode<synchronous>, transform_indices = @transform_2, window_bounds = array<i64: 1, 128>}, {transform_indices = @transform_3, window_bounds = array<i64: 4, 128>}]} {
    %c0 = arith.constant 0 : index
    %c0_0 = arith.constant 0 : index
    %0 = vector.load %arg1[%c0, %c0_0] : memref<4x128xf32, #tpu.memory_space<vmem>>, vector<4x128xf32>
    %1 = tpu.iota {dimensions = array<i32: 1>} : vector<1x128xi32>
    %c0_i32 = arith.constant 0 : i32
    %2 = vector.broadcast %c0_i32 : i32 to vector<1x128xi32>
    %3 = arith.cmpi sge, %1, %2 : vector<1x128xi32>
    %c32_i32 = arith.constant 32 : i32
    %4 = vector.broadcast %c32_i32 : i32 to vector<1x128xi32>
    %5 = arith.cmpi slt, %1, %4 : vector<1x128xi32>
    %6 = arith.andi %3, %5 : vector<1x128xi1>
    %c32_i32_1 = arith.constant 32 : i32
    %7 = vector.broadcast %c32_i32_1 : i32 to vector<1x128xi32>
    %8 = arith.cmpi sge, %1, %7 : vector<1x128xi32>
    %c64_i32 = arith.constant 64 : i32
    %9 = vector.broadcast %c64_i32 : i32 to vector<1x128xi32>
    %10 = arith.cmpi slt, %1, %9 : vector<1x128xi32>
    %11 = arith.andi %8, %10 : vector<1x128xi1>
    %c64_i32_2 = arith.constant 64 : i32
    %12 = vector.broadcast %c64_i32_2 : i32 to vector<1x128xi32>
    %13 = arith.cmpi sge, %1, %12 : vector<1x128xi32>
    %c96_i32 = arith.constant 96 : i32
    %14 = vector.broadcast %c96_i32 : i32 to vector<1x128xi32>
    %15 = arith.cmpi slt, %1, %14 : vector<1x128xi32>
    %16 = arith.andi %13, %15 : vector<1x128xi1>
    %c96_i32_3 = arith.constant 96 : i32
    %17 = vector.broadcast %c96_i32_3 : i32 to vector<1x128xi32>
    %18 = arith.cmpi sge, %1, %17 : vector<1x128xi32>
    %c128_i32 = arith.constant 128 : i32
    %19 = vector.broadcast %c128_i32 : i32 to vector<1x128xi32>
    %20 = arith.cmpi slt, %1, %19 : vector<1x128xi32>
    %21 = arith.andi %18, %20 : vector<1x128xi1>
    %cst = arith.constant 0.000000e+00 : f32
    %22 = vector.broadcast %cst : f32 to vector<4x128xf32>
    %cst_4 = arith.constant 0.000000e+00 : f32
    %23 = vector.shape_cast %6 : vector<1x128xi1> to vector<1x128xi1>
    %24 = vector.broadcast %23 : vector<1x128xi1> to vector<4x128xi1>
    %25 = vector.broadcast %cst_4 : f32 to vector<4x128xf32>
    %26 = arith.select %24, %0, %25 : vector<4x128xi1>, vector<4x128xf32>
    %cst_5 = arith.constant dense<0.000000e+00> : vector<4xf32>
    %27 = vector.multi_reduction <add>, %26, %cst_5 [1] : vector<4x128xf32> to vector<4xf32>
    %28 = vector.shape_cast %27 : vector<4xf32> to vector<4x1xf32>
    %29 = vector.shape_cast %6 : vector<1x128xi1> to vector<1x128xi1>
    %30 = vector.broadcast %29 : vector<1x128xi1> to vector<4x128xi1>
    %31 = vector.shape_cast %28 : vector<4x1xf32> to vector<4x1xf32>
    %32 = vector.broadcast %31 : vector<4x1xf32> to vector<4x128xf32>
    %33 = arith.select %30, %32, %22 : vector<4x128xi1>, vector<4x128xf32>
    %cst_6 = arith.constant 0.000000e+00 : f32
    %34 = vector.shape_cast %11 : vector<1x128xi1> to vector<1x128xi1>
    %35 = vector.broadcast %34 : vector<1x128xi1> to vector<4x128xi1>
    %36 = vector.broadcast %cst_6 : f32 to vector<4x128xf32>
    %37 = arith.select %35, %0, %36 : vector<4x128xi1>, vector<4x128xf32>
    %cst_7 = arith.constant dense<0.000000e+00> : vector<4xf32>
    %38 = vector.multi_reduction <add>, %37, %cst_7 [1] : vector<4x128xf32> to vector<4xf32>
    %39 = vector.shape_cast %38 : vector<4xf32> to vector<4x1xf32>
    %40 = vector.shape_cast %11 : vector<1x128xi1> to vector<1x128xi1>
    %41 = vector.broadcast %40 : vector<1x128xi1> to vector<4x128xi1>
    %42 = vector.shape_cast %39 : vector<4x1xf32> to vector<4x1xf32>
    %43 = vector.broadcast %42 : vector<4x1xf32> to vector<4x128xf32>
    %44 = arith.select %41, %43, %33 : vector<4x128xi1>, vector<4x128xf32>
    %cst_8 = arith.constant 0.000000e+00 : f32
    %45 = vector.shape_cast %16 : vector<1x128xi1> to vector<1x128xi1>
    %46 = vector.broadcast %45 : vector<1x128xi1> to vector<4x128xi1>
    %47 = vector.broadcast %cst_8 : f32 to vector<4x128xf32>
    %48 = arith.select %46, %0, %47 : vector<4x128xi1>, vector<4x128xf32>
    %cst_9 = arith.constant dense<0.000000e+00> : vector<4xf32>
    %49 = vector.multi_reduction <add>, %48, %cst_9 [1] : vector<4x128xf32> to vector<4xf32>
    %50 = vector.shape_cast %49 : vector<4xf32> to vector<4x1xf32>
    %51 = vector.shape_cast %16 : vector<1x128xi1> to vector<1x128xi1>
    %52 = vector.broadcast %51 : vector<1x128xi1> to vector<4x128xi1>
    %53 = vector.shape_cast %50 : vector<4x1xf32> to vector<4x1xf32>
    %54 = vector.broadcast %53 : vector<4x1xf32> to vector<4x128xf32>
    %55 = arith.select %52, %54, %44 : vector<4x128xi1>, vector<4x128xf32>
    %cst_10 = arith.constant 0.000000e+00 : f32
    %56 = vector.shape_cast %21 : vector<1x128xi1> to vector<1x128xi1>
    %57 = vector.broadcast %56 : vector<1x128xi1> to vector<4x128xi1>
    %58 = vector.broadcast %cst_10 : f32 to vector<4x128xf32>
    %59 = arith.select %57, %0, %58 : vector<4x128xi1>, vector<4x128xf32>
    %cst_11 = arith.constant dense<0.000000e+00> : vector<4xf32>
    %60 = vector.multi_reduction <add>, %59, %cst_11 [1] : vector<4x128xf32> to vector<4xf32>
    %61 = vector.shape_cast %60 : vector<4xf32> to vector<4x1xf32>
    %62 = vector.shape_cast %21 : vector<1x128xi1> to vector<1x128xi1>
    %63 = vector.broadcast %62 : vector<1x128xi1> to vector<4x128xi1>
    %64 = vector.shape_cast %61 : vector<4x1xf32> to vector<4x1xf32>
    %65 = vector.broadcast %64 : vector<4x1xf32> to vector<4x128xf32>
    %66 = arith.select %63, %65, %55 : vector<4x128xi1>, vector<4x128xf32>
    %cst_12 = arith.constant 3.125000e-02 : f32
    %67 = vector.broadcast %cst_12 : f32 to vector<4x128xf32>
    %68 = arith.mulf %66, %67 : vector<4x128xf32>
    %69 = arith.subf %0, %68 : vector<4x128xf32>
    %70 = arith.mulf %69, %69 : vector<4x128xf32>
    %cst_13 = arith.constant 0.000000e+00 : f32
    %71 = vector.broadcast %cst_13 : f32 to vector<4x128xf32>
    %cst_14 = arith.constant 0.000000e+00 : f32
    %72 = vector.shape_cast %6 : vector<1x128xi1> to vector<1x128xi1>
    %73 = vector.broadcast %72 : vector<1x128xi1> to vector<4x128xi1>
    %74 = vector.broadcast %cst_14 : f32 to vector<4x128xf32>
    %75 = arith.select %73, %70, %74 : vector<4x128xi1>, vector<4x128xf32>
    %cst_15 = arith.constant dense<0.000000e+00> : vector<4xf32>
    %76 = vector.multi_reduction <add>, %75, %cst_15 [1] : vector<4x128xf32> to vector<4xf32>
    %77 = vector.shape_cast %76 : vector<4xf32> to vector<4x1xf32>
    %78 = vector.shape_cast %6 : vector<1x128xi1> to vector<1x128xi1>
    %79 = vector.broadcast %78 : vector<1x128xi1> to vector<4x128xi1>
    %80 = vector.shape_cast %77 : vector<4x1xf32> to vector<4x1xf32>
    %81 = vector.broadcast %80 : vector<4x1xf32> to vector<4x128xf32>
    %82 = arith.select %79, %81, %71 : vector<4x128xi1>, vector<4x128xf32>
    %cst_16 = arith.constant 0.000000e+00 : f32
    %83 = vector.shape_cast %11 : vector<1x128xi1> to vector<1x128xi1>
    %84 = vector.broadcast %83 : vector<1x128xi1> to vector<4x128xi1>
    %85 = vector.broadcast %cst_16 : f32 to vector<4x128xf32>
    %86 = arith.select %84, %70, %85 : vector<4x128xi1>, vector<4x128xf32>
    %cst_17 = arith.constant dense<0.000000e+00> : vector<4xf32>
    %87 = vector.multi_reduction <add>, %86, %cst_17 [1] : vector<4x128xf32> to vector<4xf32>
    %88 = vector.shape_cast %87 : vector<4xf32> to vector<4x1xf32>
    %89 = vector.shape_cast %11 : vector<1x128xi1> to vector<1x128xi1>
    %90 = vector.broadcast %89 : vector<1x128xi1> to vector<4x128xi1>
    %91 = vector.shape_cast %88 : vector<4x1xf32> to vector<4x1xf32>
    %92 = vector.broadcast %91 : vector<4x1xf32> to vector<4x128xf32>
    %93 = arith.select %90, %92, %82 : vector<4x128xi1>, vector<4x128xf32>
    %cst_18 = arith.constant 0.000000e+00 : f32
    %94 = vector.shape_cast %16 : vector<1x128xi1> to vector<1x128xi1>
    %95 = vector.broadcast %94 : vector<1x128xi1> to vector<4x128xi1>
    %96 = vector.broadcast %cst_18 : f32 to vector<4x128xf32>
    %97 = arith.select %95, %70, %96 : vector<4x128xi1>, vector<4x128xf32>
    %cst_19 = arith.constant dense<0.000000e+00> : vector<4xf32>
    %98 = vector.multi_reduction <add>, %97, %cst_19 [1] : vector<4x128xf32> to vector<4xf32>
    %99 = vector.shape_cast %98 : vector<4xf32> to vector<4x1xf32>
    %100 = vector.shape_cast %16 : vector<1x128xi1> to vector<1x128xi1>
    %101 = vector.broadcast %100 : vector<1x128xi1> to vector<4x128xi1>
    %102 = vector.shape_cast %99 : vector<4x1xf32> to vector<4x1xf32>
    %103 = vector.broadcast %102 : vector<4x1xf32> to vector<4x128xf32>
    %104 = arith.select %101, %103, %93 : vector<4x128xi1>, vector<4x128xf32>
    %cst_20 = arith.constant 0.000000e+00 : f32
    %105 = vector.shape_cast %21 : vector<1x128xi1> to vector<1x128xi1>
    %106 = vector.broadcast %105 : vector<1x128xi1> to vector<4x128xi1>
    %107 = vector.broadcast %cst_20 : f32 to vector<4x128xf32>
    %108 = arith.select %106, %70, %107 : vector<4x128xi1>, vector<4x128xf32>
    %cst_21 = arith.constant dense<0.000000e+00> : vector<4xf32>
    %109 = vector.multi_reduction <add>, %108, %cst_21 [1] : vector<4x128xf32> to vector<4xf32>
    %110 = vector.shape_cast %109 : vector<4xf32> to vector<4x1xf32>
    %111 = vector.shape_cast %21 : vector<1x128xi1> to vector<1x128xi1>
    %112 = vector.broadcast %111 : vector<1x128xi1> to vector<4x128xi1>
    %113 = vector.shape_cast %110 : vector<4x1xf32> to vector<4x1xf32>
    %114 = vector.broadcast %113 : vector<4x1xf32> to vector<4x128xf32>
    %115 = arith.select %112, %114, %104 : vector<4x128xi1>, vector<4x128xf32>
    %cst_22 = arith.constant 3.125000e-02 : f32
    %116 = vector.broadcast %cst_22 : f32 to vector<4x128xf32>
    %117 = arith.mulf %115, %116 : vector<4x128xf32>
    %cst_23 = arith.constant 9.99999974E-6 : f32
    %118 = vector.broadcast %cst_23 : f32 to vector<4x128xf32>
    %119 = arith.addf %117, %118 : vector<4x128xf32>
    %120 = math.rsqrt %119 : vector<4x128xf32>
    %121 = arith.mulf %69, %120 : vector<4x128xf32>
    %c0_24 = arith.constant 0 : index
    %c0_25 = arith.constant 0 : index
    %122 = vector.load %arg2[%c0_24, %c0_25] : memref<1x128xf32, #tpu.memory_space<vmem>>, vector<1x128xf32>
    %123 = vector.broadcast %122 : vector<1x128xf32> to vector<4x128xf32>
    %124 = arith.mulf %121, %123 : vector<4x128xf32>
    %c0_26 = arith.constant 0 : index
    %c0_27 = arith.constant 0 : index
    %125 = vector.load %arg3[%c0_26, %c0_27] : memref<1x128xf32, #tpu.memory_space<vmem>>, vector<1x128xf32>
    %126 = vector.broadcast %125 : vector<1x128xf32> to vector<4x128xf32>
    %127 = arith.addf %124, %126 : vector<4x128xf32>
    %c0_28 = arith.constant 0 : index
    %c0_29 = arith.constant 0 : index
    %128 = vector.load %arg4[%c0_28, %c0_29] : memref<4x128xf32, #tpu.memory_space<vmem>>, vector<4x128xf32>
    tpu.vector_store %arg4[%c0_28, %c0_29], %127 {strides = array<i32>} : memref<4x128xf32, #tpu.memory_space<vmem>>, vector<4x128xf32>,
    return
  }
  func.func @transform_0(%arg0: i32) -> (i32, i32) {
    %c0_i32 = arith.constant 0 : i32
    %c0_i32_0 = arith.constant 0 : i32
    return %arg0, %c0_i32 : i32, i32
  }
  func.func @transform_1(%arg0: i32) -> (i32, i32) {
    %c0_i32 = arith.constant 0 : i32
    %c0_i32_0 = arith.constant 0 : i32
    %c0_i32_1 = arith.constant 0 : i32
    return %c0_i32, %c0_i32_0 : i32, i32
  }
  func.func @transform_2(%arg0: i32) -> (i32, i32) {
    %c0_i32 = arith.constant 0 : i32
    %c0_i32_0 = arith.constant 0 : i32
    %c0_i32_1 = arith.constant 0 : i32
    return %c0_i32, %c0_i32_0 : i32, i32
  }
  func.func @transform_3(%arg0: i32) -> (i32, i32) {
    %c0_i32 = arith.constant 0 : i32
    %c0_i32_0 = arith.constant 0 : i32
    return %arg0, %c0_i32 : i32, i32
  }
}

</mosaic_0001>

<llo_original>
// kernel: tpu_custom_call.1
$region0: #{tpu_custom_call.1}
  #allocation0 [shape = 'u32[]', space=smem, size = 0x4, offset = 0x4, fixed_abs, tag = 'smem constant byte address 0x4 - core index']
  #allocation1 [shape = 'u32[144,128]{1,0:T(1,128)}', space=vmem, size = 0x12000, scoped, tag = 'internal scratch']
  %s0 = inlined_call_operand.hbm [shape: f32[4,128], index: 0, kind: input, shape index: {}]
  %s1 = inlined_call_operand.vmem [shape: f32[1,128], index: 1, kind: input, shape index: {}]
  %s2 = inlined_call_operand.vmem [shape: f32[1,128], index: 2, kind: input, shape index: {}]
  %s3 = inlined_call_operand.hbm [shape: f32[4,128], index: 3, kind: output, shape index: {}]
  %s4 = sld [smem:[#allocation0]]
  $region26: #{tpu_custom_call.1} parent=0
    _
  %s6 = ssub.s32 1, %s4
  %s7 = scalar_select 0, %s6, %s4
  $region1: #{tpu_custom_call.1} parent=0
    #allocation2 [shape = 'u8[2048]{0}', space=vmem, size = 0x800, scoped, tag = 'input window, operand 0, single buffered']
    #allocation3 [shape = 's32[1]{0}', space=sflag, size = 0x4, scoped, tag = 'scoped memory for tpu_custom_call.1']
    #allocation4 [shape = 's32[1]{0}', space=sflag, size = 0x4, scoped, tag = 'scoped memory for tpu_custom_call.1']
    #allocation5 [shape = 'u8[2048]{0}', space=vmem, size = 0x800, scoped, tag = 'output window, operand 0, single buffered']
    %8 = vsyncpa [#allocation3], 0
    %9 = vsyncpa [#allocation4], 0
    // Predicated region
    $region2: #{tpu_custom_call.1} parent=1 // pred_check
      _
    $region3: #{tpu_custom_call.1} parent=1 // pred_check_branch
      %11 = sbr.rel (0) target = $region5
    $region4: #{tpu_custom_call.1} parent=1 // pred_region
      %s13 = ssub.s32 64, 64
      %14 = vsyncadd [#allocation3], %s13
      %s16 = sshll.u32 [#allocation2], 4
      %s17 = int_to_ptr.vmem [resolvable:$true] %s16
      %19 = dma.hbm_to_vmem [thread:$0]  %s0, 64, %s17, [#allocation3]
    $region5: #{tpu_custom_call.1} parent=1 // pred_fallthru
      _
    // Predicated region
    $region6: #{tpu_custom_call.1} parent=1 // pred_check
      _
    $region7: #{tpu_custom_call.1} parent=1 // pred_check_branch
      %21 = sbr.rel (0) target = $region9
    $region8: #{tpu_custom_call.1} parent=1 // pred_region
      _
    $region9: #{tpu_custom_call.1} parent=1 // pred_fallthru
      _
    // Predicated region
    $region10: #{tpu_custom_call.1} parent=1 // pred_check
      _
    $region11: #{tpu_custom_call.1} parent=1 // pred_check_branch
      %23 = sbr.rel (0) target = $region13
    $region12: #{tpu_custom_call.1} parent=1 // pred_region
      _
    $region13: #{tpu_custom_call.1} parent=1 // pred_fallthru
      _
    // Predicated region
    $region14: #{tpu_custom_call.1} parent=1 // pred_check
      _
    $region15: #{tpu_custom_call.1} parent=1 // pred_check_branch
      %25 = sbr.rel (0) target = $region17
    $region16: #{tpu_custom_call.1} parent=1 // pred_region
      %26 = dma.done [#allocation3], 64
    $region17: #{tpu_custom_call.1} parent=1 // pred_fallthru
      _
    %v27 = vld [vmem:[#allocation2] sm:$0xf]
    %v28 = vlaneseq
    %v29 = vand.u32 %v28, 127
    %vm30 = vcmp.ge.s32.totalorder %v29, 0
    %vm31 = vcmp.lt.s32.totalorder %v29, 32
    %vm32 = vmand %vm30, %vm31
    %vm33 = vcmp.ge.s32.totalorder %v29, 32
    %vm34 = vcmp.lt.s32.totalorder %v29, 64
    %vm35 = vmand %vm33, %vm34
    %vm36 = vcmp.ge.s32.totalorder %v29, 64
    %vm37 = vcmp.lt.s32.totalorder %v29, 96
    %vm38 = vmand %vm36, %vm37
    %vm39 = vcmp.ge.s32.totalorder %v29, 96
    %vm40 = vcmp.lt.s32.totalorder %v29, 128
    %vm41 = vmand %vm39, %vm40
    %v42 = vsel %vm32, 1, 0
    %vm43 = vcmp.eq.s32.totalorder %v42, 1
    %v44 = vsel %vm43, %v27, 0.0
    %vm45 = vcmask 1043456
    %v46 = vsel %vm45, %v44, 0.0
    %47 = vadd.xlane.f32.xlu0 %v46
    %v48 = vpop.xlane.xlu0 %47
    %v49 = vsel %vm43, %v48, 0.0
    %v50 = vsel %vm35, 1, 0
    %vm51 = vcmp.eq.s32.totalorder %v50, 1
    %v52 = vsel %vm51, %v27, 0.0
    %v53 = vsel %vm45, %v52, 0.0
    %54 = vadd.xlane.f32.xlu0 %v53
    %v55 = vpop.xlane.xlu0 %54
    %v56 = vsel %vm51, %v55, %v49
    %v57 = vsel %vm38, 1, 0
    %vm58 = vcmp.eq.s32.totalorder %v57, 1
    %v59 = vsel %vm58, %v27, 0.0
    %v60 = vsel %vm45, %v59, 0.0
    %61 = vadd.xlane.f32.xlu0 %v60
    %v62 = vpop.xlane.xlu0 %61
    %v63 = vsel %vm58, %v62, %v56
    %v64 = vsel %vm41, 1, 0
    %vm65 = vcmp.eq.s32.totalorder %v64, 1
    %v66 = vsel %vm65, %v27, 0.0
    %v67 = vsel %vm45, %v66, 0.0
    %68 = vadd.xlane.f32.xlu0 %v67
    %v69 = vpop.xlane.xlu0 %68
    %v70 = vsel %vm65, %v69, %v63
    %v71 = vmul.f32 %v70, 0.03125
    %v72 = vsub.f32 %v27, %v71
    %v73 = vmul.f32 %v72, %v72
    %v74 = vsel %vm43, %v73, 0.0
    %v75 = vsel %vm45, %v74, 0.0
    %76 = vadd.xlane.f32.xlu0 %v75
    %v77 = vpop.xlane.xlu0 %76
    %v78 = vsel %vm43, %v77, 0.0
    %v79 = vsel %vm51, %v73, 0.0
    %v80 = vsel %vm45, %v79, 0.0
    %81 = vadd.xlane.f32.xlu0 %v80
    %v82 = vpop.xlane.xlu0 %81
    %v83 = vsel %vm51, %v82, %v78
    %v84 = vsel %vm58, %v73, 0.0
    %v85 = vsel %vm45, %v84, 0.0
    %86 = vadd.xlane.f32.xlu0 %v85
    %v87 = vpop.xlane.xlu0 %86
    %v88 = vsel %vm58, %v87, %v83
    %v89 = vsel %vm65, %v73, 0.0
    %v90 = vsel %vm45, %v89, 0.0
    %91 = vadd.xlane.f32.xlu0 %v90
    %v92 = vpop.xlane.xlu0 %91
    %v93 = vsel %vm65, %v92, %v88
    %v94 = vmul.f32 %v93, 0.03125
    %v95 = vadd.f32 %v94, 1e-05
    %v96 = vrsqrt.pop %v95
    %v97 = vmul.f32 %v72, %v96
    %v98 = vld [vmem:[%s1] sm:$0x1]
    %v100 = vlaneseq
    %v101 = vshrl.u32 %v100, 7
    %v102 = vsub.s32 0, %v101
    %v103 = vrot.slane %v98, %v102
    %v105 = vmul.f32 %v97, %v103
    %v106 = vld [vmem:[%s2] sm:$0x1]
    %v108 = vlaneseq
    %v109 = vshrl.u32 %v108, 7
    %v110 = vsub.s32 0, %v109
    %v111 = vrot.slane %v106, %v110
    %v113 = vadd.f32 %v105, %v111
    %114 = vst [vmem:[#allocation5] sm:$0xf] %v113
    // Predicated region
    $region18: #{tpu_custom_call.1} parent=1 // pred_check
      _
    $region19: #{tpu_custom_call.1} parent=1 // pred_check_branch
      %116 = sbr.rel (0) target = $region21
    $region20: #{tpu_custom_call.1} parent=1 // pred_region
      %s118 = ssub.s32 64, 64
      %119 = vsyncadd [#allocation4], %s118
      %s121 = sshll.u32 [#allocation5], 4
      %s122 = int_to_ptr.vmem [resolvable:$true] %s121
      %124 = dma.vmem_to_hbm [thread:$0]  %s122, 64, %s3, [#allocation4]
    $region21: #{tpu_custom_call.1} parent=1 // pred_fallthru
      _
    // Predicated region
    $region22: #{tpu_custom_call.1} parent=1 // pred_check
      _
    $region23: #{tpu_custom_call.1} parent=1 // pred_check_branch
      %126 = sbr.rel (0) target = $region25
    $region24: #{tpu_custom_call.1} parent=1 // pred_region
      %127 = dma.done [#allocation4], 64
    $region25: #{tpu_custom_call.1} parent=1 // pred_fallthru
      _
    %128 = vsyncpa [#allocation3], 1
    %129 = vsyncpa [#allocation4], 1

</llo_original>
